<compile_context>
chip_gen: v5e
topology: v5e:2x2
jax: 0.10.0
libtpu: 0.0.40
codegen_flags: <defaults>
</compile_context>

<pallas_src>
import functools

import jax
import jax.numpy as jnp
from jax.experimental import pallas as pl
from jax.experimental.pallas import tpu as pltpu


# ---------------------------------------------------------------------------
# Kernels
# ---------------------------------------------------------------------------

def _se_fused_kernel(x_ref, w1_ref, b1_ref, w2_ref, b2_ref, ones_ref, o_ref,
                     *, inv_t):
    # x_ref:    (C, T)       one batch element (leading batch dim squeezed)
    # w1_ref:   (bneck, C)   conv1 weight (PyTorch layout, trailing k=1 dropped)
    # b1_ref:   (bneck, 1)   f32
    # w2_ref:   (C, bneck)   conv2 weight
    # b2_ref:   (C, 1)       f32
    # ones_ref: (T, 1)       resident column of ones (x dtype)

    # AdaptiveAvgPool1d(1): time reduction on the MXU, f32 accumulation.
    s = jnp.dot(x_ref[...], ones_ref[...],
                preferred_element_type=jnp.float32) * inv_t               # (C, 1)

    # Conv1d(C -> bneck, k=1) + ReLU (matrix-vector on the MXU).
    h = jnp.dot(w1_ref[...], s.astype(w1_ref.dtype),
                preferred_element_type=jnp.float32) + b1_ref[...]         # (bneck, 1)
    h = jnp.maximum(h, 0.0)

    # Conv1d(bneck -> C, k=1) + Sigmoid.
    g = jnp.dot(w2_ref[...], h.astype(w2_ref.dtype),
                preferred_element_type=jnp.float32) + b2_ref[...]         # (C, 1)
    g = jax.nn.sigmoid(g)

    # Re-read x at the use site (bounds the full-tile live range); scale in
    # the input's native dtype (no full f32 tile).
    x = x_ref[...]
    o_ref[...] = (x * g.astype(x.dtype)).astype(o_ref.dtype)


def _se_scale_kernel(x_ref, g_ref, o_ref):
    # Broadcast-scale pass of the T-tiled fallback.  grid = (B, nT).
    # x_ref/o_ref: (C, tT); g_ref: (C, 1) in x dtype.
    x = x_ref[...]
    o_ref[...] = (x * g_ref[...].astype(x.dtype)).astype(o_ref.dtype)


# ---------------------------------------------------------------------------
# Wrapper helpers
# ---------------------------------------------------------------------------

def _vmem_budget_bytes():
    """Generation-aware VMEM budget: capacity minus ~1/8 headroom."""
    try:
        cap = int(pltpu.get_tpu_info().vmem_capacity_bytes)
    except Exception:
        cap = 64 << 20  # conservative: v7x has only 64 MiB per TensorCore
    headroom = max(8 << 20, cap // 8)
    return max(cap - headroom, 16 << 20)


def _choose_t_tile(T, C, itemsize, target_bytes=4 << 20):
    """Lane-dense (multiple of 128) T tile of a few MiB, or full T if small."""
    lanes = (target_bytes // max(1, C * itemsize)) // 128 * 128
    lanes = max(128, int(lanes))
    if lanes >= T:
        return T          # single full-extent tile (legal for any T)
    return lanes


def _se_fused(x, w1, b1c, w2, b2c, *, budget):
    B, C, T = x.shape
    bneck = w1.shape[0]
    itemsize = jnp.dtype(x.dtype).itemsize

    ones_col = jnp.ones((T, 1), dtype=x.dtype)   # resident, built once host-side

    block_bytes = C * T * itemsize
    w_bytes = (w1.size + w2.size) * jnp.dtype(w1.dtype).itemsize
    needed = 4 * block_bytes + 2 * (w_bytes + T * itemsize) + (2 << 20)
    vmem_limit = int(min(max(needed, 16 << 20), budget))

    cost = pl.CostEstimate(
        flops=2 * B * C * T + 4 * B * C * bneck,
        transcendentals=B * C,
        bytes_accessed=2 * B * C * T * itemsize,
    )

    kernel = functools.partial(_se_fused_kernel, inv_t=1.0 / T)

    return pl.pallas_call(
        kernel,
        out_shape=jax.ShapeDtypeStruct((B, C, T), x.dtype),
        grid=(B,),
        in_specs=[
            pl.BlockSpec((pl.Squeezed(), C, T), lambda b: (b, 0, 0)),   # x[b]
            pl.BlockSpec((bneck, C), lambda b: (0, 0)),                 # W1 (resident)
            pl.BlockSpec((bneck, 1), lambda b: (0, 0)),                 # b1
            pl.BlockSpec((C, bneck), lambda b: (0, 0)),                 # W2 (resident)
            pl.BlockSpec((C, 1), lambda b: (0, 0)),                     # b2
            pl.BlockSpec((T, 1), lambda b: (0, 0)),                     # ones column
        ],
        out_specs=pl.BlockSpec((pl.Squeezed(), C, T), lambda b: (b, 0, 0)),
        compiler_params=pltpu.CompilerParams(
            dimension_semantics=("parallel",),
            vmem_limit_bytes=vmem_limit,
        ),
        cost_estimate=cost,
    )(x, w1, b1c, w2, b2c, ones_col)


def _se_two_pass(x, w1, b1, w2, b2, *, budget):
    B, C, T = x.shape
    itemsize = jnp.dtype(x.dtype).itemsize

    # Pass 1 (gate): tiny reduction + mat-vecs in plain JAX -- one fused HBM
    # read of x with f32 accumulation; the result is only (B, C).
    s = jnp.mean(x, axis=-1, dtype=jnp.float32)                          # (B, C)
    h = jnp.maximum(s @ w1.astype(jnp.float32).T + b1.astype(jnp.float32), 0.0)
    g = jax.nn.sigmoid(h @ w2.astype(jnp.float32).T + b2.astype(jnp.float32))
    g = g.astype(x.dtype).reshape(B, C, 1)

    # Pass 2 (scale): T-tiled Pallas kernel, both grid axes parallel so the
    # two TensorCores on v7x split the work even for B == 1.
    tT = _choose_t_tile(T, C, itemsize)
    nT = pl.cdiv(T, tT)

    block_bytes = C * tT * itemsize
    needed = 4 * block_bytes + 4 * C * itemsize + (2 << 20)
    vmem_limit = int(min(max(needed, 16 << 20), budget))

    cost = pl.CostEstimate(
        flops=B * C * T,
        transcendentals=0,
        bytes_accessed=2 * B * C * T * itemsize,
    )

    return pl.pallas_call(
        _se_scale_kernel,
        out_shape=jax.ShapeDtypeStruct((B, C, T), x.dtype),
        grid=(B, nT),
        in_specs=[
            pl.BlockSpec((pl.Squeezed(), C, tT), lambda b, t: (b, 0, t)),  # x tile
            pl.BlockSpec((pl.Squeezed(), C, 1), lambda b, t: (b, 0, 0)),   # g[b]
        ],
        out_specs=pl.BlockSpec((pl.Squeezed(), C, tT), lambda b, t: (b, 0, t)),
        compiler_params=pltpu.CompilerParams(
            dimension_semantics=("parallel", "parallel"),
            vmem_limit_bytes=vmem_limit,
        ),
        cost_estimate=cost,
    )(x, g)


def se_module(x, w1, b1, w2, b2, *, force_two_pass=False):
    """SEModule forward.

    x: (B, C, T); w1: (bneck, C); b1: (bneck,); w2: (C, bneck); b2: (C,).
    """
    B, C, T = x.shape
    bneck = w1.shape[0]
    itemsize = jnp.dtype(x.dtype).itemsize

    budget = _vmem_budget_bytes()

    block_bytes = C * T * itemsize
    w_bytes = (w1.size + w2.size) * jnp.dtype(w1.dtype).itemsize
    fused_needed = 4 * block_bytes + 2 * (w_bytes + T * itemsize) + (2 << 20)

    # Fall back to the two-pass path when the per-batch block does not fit
    # the per-generation VMEM budget, or when a single-element batch would
    # leave one v7x TensorCore idle on a large input.
    use_two_pass = (
        force_two_pass
        or fused_needed > budget
        or (B == 1 and block_bytes > (8 << 20))
    )

    if use_two_pass:
        return _se_two_pass(x, w1, b1, w2, b2, budget=budget)

    # Biases as f32 column vectors matching the column-vector dataflow.
    b1c = b1.reshape(bneck, 1).astype(jnp.float32)
    b2c = b2.reshape(C, 1).astype(jnp.float32)
    return _se_fused(x, w1, b1c, w2, b2c, budget=budget)


if __name__ == "__main__":
    B, C, T = 2, 16, 32          # T deliberately not a multiple of 128
    BOTTLENECK = 8               # PyTorch default is 128; small for the demo

    key = jax.random.PRNGKey(0)
    k_x, k_w1, k_b1, k_w2, k_b2 = jax.random.split(key, 5)

    x = jax.random.normal(k_x, (B, C, T), dtype=jnp.float32)
    # Conv1d(k=1) params; PyTorch weight shape is (out, in, 1), trailing 1 dropped.
    w1 = jax.random.normal(k_w1, (BOTTLENECK, C), dtype=jnp.float32) * 0.1
    b1 = jax.random.normal(k_b1, (BOTTLENECK,), dtype=jnp.float32) * 0.1
    w2 = jax.random.normal(k_w2, (C, BOTTLENECK), dtype=jnp.float32) * 0.1
    b2 = jax.random.normal(k_b2, (C,), dtype=jnp.float32) * 0.1

    # Pure-JAX reference (same math as the PyTorch forward).
    s_ref = jnp.mean(x, axis=-1)
    h_ref = jnp.maximum(s_ref @ w1.T + b1, 0.0)
    g_ref = jax.nn.sigmoid(h_ref @ w2.T + b2)
    ref = x * g_ref[:, :, None]

    # Fused single-pass path.
    out_fused = jax.block_until_ready(se_module(x, w1, b1, w2, b2))
    assert jnp.allclose(out_fused, ref, atol=1e-5, rtol=1e-5), "fused path mismatch"

    # T-tiled two-pass fallback path (exercised explicitly for coverage).
    out_tiled = jax.block_until_ready(
        se_module(x, w1, b1, w2, b2, force_two_pass=True))
    assert jnp.allclose(out_tiled, ref, atol=1e-5, rtol=1e-5), "two-pass path mismatch"

    print("KERNEL_OK")
</pallas_src>

<mosaic_0001>
module attributes {stable_mosaic.version = 11 : i64} {
  func.func @_se_fused_kernel(%arg0: i32, %arg1: memref<1x16x32xf32, #tpu.memory_space<vmem>>, %arg2: memref<8x16xf32, #tpu.memory_space<vmem>>, %arg3: memref<8x1xf32, #tpu.memory_space<vmem>>, %arg4: memref<16x8xf32, #tpu.memory_space<vmem>>, %arg5: memref<16x1xf32, #tpu.memory_space<vmem>>, %arg6: memref<32x1xf32, #tpu.memory_space<vmem>>, %arg7: memref<1x16x32xf32, #tpu.memory_space<vmem>>) attributes {dimension_semantics = [#tpu.dimension_semantics<parallel>], iteration_bounds = array<i64: 2>, scalar_prefetch = 0 : i64, scratch_operands = 0 : i64, tpu.core_type = #tpu.core_type<tc>, window_params = [{transform_indices = @transform_0, window_bounds = array<i64: 1, 16, 32>}, {pipeline_mode = #tpu.pipeline_mode<synchronous>, transform_indices = @transform_1, window_bounds = array<i64: 8, 16>}, {pipeline_mode = #tpu.pipeline_mode<synchronous>, transform_indices = @transform_2, window_bounds = array<i64: 8, 1>}, {pipeline_mode = #tpu.pipeline_mode<synchronous>, transform_indices = @transform_3, window_bounds = array<i64: 16, 8>}, {pipeline_mode = #tpu.pipeline_mode<synchronous>, transform_indices = @transform_4, window_bounds = array<i64: 16, 1>}, {pipeline_mode = #tpu.pipeline_mode<synchronous>, transform_indices = @transform_5, window_bounds = array<i64: 32, 1>}, {transform_indices = @transform_6, window_bounds = array<i64: 1, 16, 32>}]} {
    %c0 = arith.constant 0 : index
    %c0_0 = arith.constant 0 : index
    %c0_1 = arith.constant 0 : index
    %0 = vector.load %arg1[%c0, %c0_0, %c0_1] : memref<1x16x32xf32, #tpu.memory_space<vmem>>, vector<1x16x32xf32>
    %1 = vector.shape_cast %0 : vector<1x16x32xf32> to vector<16x32xf32>
    %c0_2 = arith.constant 0 : index
    %c0_3 = arith.constant 0 : index
    %2 = vector.load %arg6[%c0_2, %c0_3] : memref<32x1xf32, #tpu.memory_space<vmem>>, vector<32x1xf32>
    %cst = arith.constant dense<0.000000e+00> : vector<16x1xf32>
    %3 = tpu.matmul %1, %2, %cst {dimension_numbers = #tpu.dot_dimension_numbers<[1], [0], [0], [1], [0, 0, 1, 1], [], []>} : vector<16x32xf32>, vector<32x1xf32>, vector<16x1xf32> -> vector<16x1xf32>
    %cst_4 = arith.constant 3.125000e-02 : f32
    %4 = vector.broadcast %cst_4 : f32 to vector<16x1xf32>
    %5 = arith.mulf %3, %4 : vector<16x1xf32>
    %c0_5 = arith.constant 0 : index
    %c0_6 = arith.constant 0 : index
    %6 = vector.load %arg2[%c0_5, %c0_6] : memref<8x16xf32, #tpu.memory_space<vmem>>, vector<8x16xf32>
    %cst_7 = arith.constant dense<0.000000e+00> : vector<8x1xf32>
    %7 = tpu.matmul %6, %5, %cst_7 {dimension_numbers = #tpu.dot_dimension_numbers<[1], [0], [0], [1], [0, 0, 1, 1], [], []>} : vector<8x16xf32>, vector<16x1xf32>, vector<8x1xf32> -> vector<8x1xf32>
    %c0_8 = arith.constant 0 : index
    %c0_9 = arith.constant 0 : index
    %8 = vector.load %arg3[%c0_8, %c0_9] : memref<8x1xf32, #tpu.memory_space<vmem>>, vector<8x1xf32>
    %9 = arith.addf %7, %8 : vector<8x1xf32>
    %cst_10 = arith.constant 0.000000e+00 : f32
    %10 = vector.broadcast %cst_10 : f32 to vector<8x1xf32>
    %11 = arith.maximumf %9, %10 : vector<8x1xf32>
    %c0_11 = arith.constant 0 : index
    %c0_12 = arith.constant 0 : index
    %12 = vector.load %arg4[%c0_11, %c0_12] : memref<16x8xf32, #tpu.memory_space<vmem>>, vector<16x8xf32>
    %cst_13 = arith.constant dense<0.000000e+00> : vector<16x1xf32>
    %13 = tpu.matmul %12, %11, %cst_13 {dimension_numbers = #tpu.dot_dimension_numbers<[1], [0], [0], [1], [0, 0, 1, 1], [], []>} : vector<16x8xf32>, vector<8x1xf32>, vector<16x1xf32> -> vector<16x1xf32>
    %c0_14 = arith.constant 0 : index
    %c0_15 = arith.constant 0 : index
    %14 = vector.load %arg5[%c0_14, %c0_15] : memref<16x1xf32, #tpu.memory_space<vmem>>, vector<16x1xf32>
    %15 = arith.addf %13, %14 : vector<16x1xf32>
    %16 = arith.negf %15 : vector<16x1xf32>
    %17 = math.exp %16 : vector<16x1xf32>
    %cst_16 = arith.constant 1.000000e+00 : f32
    %18 = vector.broadcast %cst_16 : f32 to vector<16x1xf32>
    %19 = arith.addf %18, %17 : vector<16x1xf32>
    %20 = arith.divf %18, %19 : vector<16x1xf32>
    %c0_17 = arith.constant 0 : index
    %c0_18 = arith.constant 0 : index
    %c0_19 = arith.constant 0 : index
    %21 = vector.load %arg1[%c0_17, %c0_18, %c0_19] : memref<1x16x32xf32, #tpu.memory_space<vmem>>, vector<1x16x32xf32>
    %22 = vector.shape_cast %21 : vector<1x16x32xf32> to vector<16x32xf32>
    %23 = vector.broadcast %20 : vector<16x1xf32> to vector<16x32xf32>
    %24 = arith.mulf %22, %23 : vector<16x32xf32>
    %c0_20 = arith.constant 0 : index
    %c0_21 = arith.constant 0 : index
    %c0_22 = arith.constant 0 : index
    %25 = vector.load %arg7[%c0_20, %c0_21, %c0_22] : memref<1x16x32xf32, #tpu.memory_space<vmem>>, vector<1x16x32xf32>
    %26 = vector.shape_cast %25 : vector<1x16x32xf32> to vector<16x32xf32>
    %27 = vector.shape_cast %24 : vector<16x32xf32> to vector<1x16x32xf32>
    tpu.vector_store %arg7[%c0_20, %c0_21, %c0_22], %27 {strides = array<i32>} : memref<1x16x32xf32, #tpu.memory_space<vmem>>, vector<1x16x32xf32>,
    return
  }
  func.func @transform_0(%arg0: i32) -> (i32, i32, i32) {
    %c0_i32 = arith.constant 0 : i32
    %c0_i32_0 = arith.constant 0 : i32
    %c0_i32_1 = arith.constant 0 : i32
    return %arg0, %c0_i32, %c0_i32_0 : i32, i32, i32
  }
  func.func @transform_1(%arg0: i32) -> (i32, i32) {
    %c0_i32 = arith.constant 0 : i32
    %c0_i32_0 = arith.constant 0 : i32
    %c0_i32_1 = arith.constant 0 : i32
    return %c0_i32, %c0_i32_0 : i32, i32
  }
  func.func @transform_2(%arg0: i32) -> (i32, i32) {
    %c0_i32 = arith.constant 0 : i32
    %c0_i32_0 = arith.constant 0 : i32
    %c0_i32_1 = arith.constant 0 : i32
    return %c0_i32, %c0_i32_0 : i32, i32
  }
  func.func @transform_3(%arg0: i32) -> (i32, i32) {
    %c0_i32 = arith.constant 0 : i32
    %c0_i32_0 = arith.constant 0 : i32
    %c0_i32_1 = arith.constant 0 : i32
    return %c0_i32, %c0_i32_0 : i32, i32
  }
  func.func @transform_4(%arg0: i32) -> (i32, i32) {
    %c0_i32 = arith.constant 0 : i32
    %c0_i32_0 = arith.constant 0 : i32
    %c0_i32_1 = arith.constant 0 : i32
    return %c0_i32, %c0_i32_0 : i32, i32
  }
  func.func @transform_5(%arg0: i32) -> (i32, i32) {
    %c0_i32 = arith.constant 0 : i32
    %c0_i32_0 = arith.constant 0 : i32
    %c0_i32_1 = arith.constant 0 : i32
    return %c0_i32, %c0_i32_0 : i32, i32
  }
  func.func @transform_6(%arg0: i32) -> (i32, i32, i32) {
    %c0_i32 = arith.constant 0 : i32
    %c0_i32_0 = arith.constant 0 : i32
    %c0_i32_1 = arith.constant 0 : i32
    return %arg0, %c0_i32, %c0_i32_0 : i32, i32, i32
  }
}

</mosaic_0001>

<llo_original>
// kernel: tpu_custom_call.1
$region0: #{tpu_custom_call.1}
  #allocation0 [shape = 'u32[]', space=smem, size = 0x4, offset = 0x4, fixed_abs, tag = 'smem constant byte address 0x4 - core index']
  #allocation1 [shape = 'u32[72,128]{1,0:T(1,128)}', space=vmem, size = 0x9000, scoped, tag = 'internal scratch']
  %s0 = inlined_call_operand.vmem [shape: f32[2,16,32], index: 0, kind: input, shape index: {}]
  %s1 = inlined_call_operand.vmem [shape: f32[8,16], index: 1, kind: input, shape index: {}]
  %s2 = inlined_call_operand.vmem [shape: f32[8,1], index: 2, kind: input, shape index: {}]
  %s3 = inlined_call_operand.vmem [shape: f32[16,8], index: 3, kind: input, shape index: {}]
  %s4 = inlined_call_operand.vmem [shape: f32[16,1], index: 4, kind: input, shape index: {}]
  %s5 = inlined_call_operand.vmem [shape: f32[32,1], index: 5, kind: input, shape index: {}]
  %s6 = inlined_call_operand.hbm [shape: f32[2,16,32], index: 6, kind: output, shape index: {}]
  %s7 = sld [smem:[#allocation0]]
  $region57: #{tpu_custom_call.1} parent=0
    _
  %s9 = ssub.s32 1, %s7
  %s10 = scalar_select 0, %s9, %s7
  $region1: #{tpu_custom_call.1} parent=0
    #allocation2 [shape = 'u8[16384]{0}', space=vmem, size = 0x4000, scoped, tag = 'output window, operand 0']
    #allocation3 [shape = 's32[2]{0}', space=sflag, size = 0x8, scoped, tag = 'scoped memory for tpu_custom_call.1']
    %11 = vsyncpa [#allocation3], 0
    %s12 = scalar_lea.sflag [#allocation3], 1
    %13 = vsyncpa %s12, 0
    loop: start=0, step=1, limit=4
    $region2: #{tpu_custom_call.1} parent=1 // loop_pre_header
      _
    $region3: #{tpu_custom_call.1} parent=1 // loop_header
      %s15 = sphi 0, %s19
      %p16 = scmp.ge.s32.totalorder %s15, 4
      %s25 = sphi 0, %s27
      %s28 = sphi 0, %s25
      %s29 = sphi 0, %s28
      %s45 = sphi 0, %s29
      %s49 = sphi 0, %s49
      %s51 = sphi 0, %s49
      %s52 = sphi 0, %s51
      %s66 = sphi 0, %s52
      %s70 = sphi 0, %s70
      %s72 = sphi 0, %s70
      %s73 = sphi 0, %s72
      %s87 = sphi 0, %s73
      %s91 = sphi 0, %s91
      %s93 = sphi 0, %s91
      %s94 = sphi 0, %s93
      %s108 = sphi 0, %s94
      %s112 = sphi 0, %s112
      %s114 = sphi 0, %s112
      %s115 = sphi 0, %s114
      %s129 = sphi 0, %s115
      %s133 = sphi 0, %s133
      %s135 = sphi 0, %s133
      %s136 = sphi 0, %s135
      %s150 = sphi 0, %s136
      %s156 = sphi 0, %s158
      %s159 = sphi 0, %s156
      %s160 = sphi 0, %s159
      %s176 = sphi 0, %s160
    $region4: #{tpu_custom_call.1} parent=1 // loop_header_branch
      %18 = sbr.rel (%p16) target = $region8
    $region5: #{tpu_custom_call.1} parent=1 // loop_body
      %s20 = ssub.s32 %s15, 1
      %s21 = ssub.s32 %s15, 2
      %s22 = sadd.s32 %s15, 1
      %s23 = ssub.s32 %s15, %s22
      %p24 = scmp.eq.s32.totalorder %s23, 0
      %s26 = sadd.s32 %s25, 1
      %s27 = scalar_select %p24, %s25, %s26
      %p30 = pneg %p24
      %p31 = scmp.eq.s32.totalorder %s15, 1
      %p32 = por %p30, %p31
      %p33 = scmp.ne.s32.totalorder %s25, %s28
      %p34 = scmp.eq.s32.totalorder %s15, 0
      %p35 = por %p33, %p34
      %p36 = scmp.ne.s32.totalorder %s25, %s28
      %p37 = scmp.eq.s32.totalorder %s20, 1
      %p38 = por %p36, %p37
      %p39 = scmp.ne.s32.totalorder %s28, %s29
      %p40 = scmp.eq.s32.totalorder %s20, 0
      %p41 = por %p39, %p40
      %p42 = scmp.ne.s32.totalorder %s28, %s29
      %p43 = scmp.eq.s32.totalorder %s21, 1
      %p44 = por %p42, %p43
      %p46 = scmp.ne.s32.totalorder %s29, %s45
      %p47 = scmp.eq.s32.totalorder %s21, 0
      %p48 = por %p46, %p47
      %s50 = sadd.s32 %s49, 1
      %p53 = scmp.eq.s32.totalorder %s15, 1
      %p54 = scmp.ne.s32.totalorder %s49, %s51
      %p55 = scmp.eq.s32.totalorder %s15, 0
      %p56 = por %p54, %p55
      %p57 = scmp.ne.s32.totalorder %s49, %s51
      %p58 = scmp.eq.s32.totalorder %s20, 1
      %p59 = por %p57, %p58
      %p60 = scmp.ne.s32.totalorder %s51, %s52
      %p61 = scmp.eq.s32.totalorder %s20, 0
      %p62 = por %p60, %p61
      %p63 = scmp.ne.s32.totalorder %s51, %s52
      %p64 = scmp.eq.s32.totalorder %s21, 1
      %p65 = por %p63, %p64
      %p67 = scmp.ne.s32.totalorder %s52, %s66
      %p68 = scmp.eq.s32.totalorder %s21, 0
      %p69 = por %p67, %p68
      %s71 = sadd.s32 %s70, 1
      %p74 = scmp.eq.s32.totalorder %s15, 1
      %p75 = scmp.ne.s32.totalorder %s70, %s72
      %p76 = scmp.eq.s32.totalorder %s15, 0
      %p77 = por %p75, %p76
      %p78 = scmp.ne.s32.totalorder %s70, %s72
      %p79 = scmp.eq.s32.totalorder %s20, 1
      %p80 = por %p78, %p79
      %p81 = scmp.ne.s32.totalorder %s72, %s73
      %p82 = scmp.eq.s32.totalorder %s20, 0
      %p83 = por %p81, %p82
      %p84 = scmp.ne.s32.totalorder %s72, %s73
      %p85 = scmp.eq.s32.totalorder %s21, 1
      %p86 = por %p84, %p85
      %p88 = scmp.ne.s32.totalorder %s73, %s87
      %p89 = scmp.eq.s32.totalorder %s21, 0
      %p90 = por %p88, %p89
      %s92 = sadd.s32 %s91, 1
      %p95 = scmp.eq.s32.totalorder %s15, 1
      %p96 = scmp.ne.s32.totalorder %s91, %s93
      %p97 = scmp.eq.s32.totalorder %s15, 0
      %p98 = por %p96, %p97
      %p99 = scmp.ne.s32.totalorder %s91, %s93
      %p100 = scmp.eq.s32.totalorder %s20, 1
      %p101 = por %p99, %p100
      %p102 = scmp.ne.s32.totalorder %s93, %s94
      %p103 = scmp.eq.s32.totalorder %s20, 0
      %p104 = por %p102, %p103
      %p105 = scmp.ne.s32.totalorder %s93, %s94
      %p106 = scmp.eq.s32.totalorder %s21, 1
      %p107 = por %p105, %p106
      %p109 = scmp.ne.s32.totalorder %s94, %s108
      %p110 = scmp.eq.s32.totalorder %s21, 0
      %p111 = por %p109, %p110
      %s113 = sadd.s32 %s112, 1
      %p116 = scmp.eq.s32.totalorder %s15, 1
      %p117 = scmp.ne.s32.totalorder %s112, %s114
      %p118 = scmp.eq.s32.totalorder %s15, 0
      %p119 = por %p117, %p118
      %p120 = scmp.ne.s32.totalorder %s112, %s114
      %p121 = scmp.eq.s32.totalorder %s20, 1
      %p122 = por %p120, %p121
      %p123 = scmp.ne.s32.totalorder %s114, %s115
      %p124 = scmp.eq.s32.totalorder %s20, 0
      %p125 = por %p123, %p124
      %p126 = scmp.ne.s32.totalorder %s114, %s115
      %p127 = scmp.eq.s32.totalorder %s21, 1
      %p128 = por %p126, %p127
      %p130 = scmp.ne.s32.totalorder %s115, %s129
      %p131 = scmp.eq.s32.totalorder %s21, 0
      %p132 = por %p130, %p131
      %s134 = sadd.s32 %s133, 1
      %p137 = scmp.eq.s32.totalorder %s15, 1
      %p138 = scmp.ne.s32.totalorder %s133, %s135
      %p139 = scmp.eq.s32.totalorder %s15, 0
      %p140 = por %p138, %p139
      %p141 = scmp.ne.s32.totalorder %s133, %s135
      %p142 = scmp.eq.s32.totalorder %s20, 1
      %p143 = por %p141, %p142
      %p144 = scmp.ne.s32.totalorder %s135, %s136
      %p145 = scmp.eq.s32.totalorder %s20, 0
      %p146 = por %p144, %p145
      %p147 = scmp.ne.s32.totalorder %s135, %s136
      %p148 = scmp.eq.s32.totalorder %s21, 1
      %p149 = por %p147, %p148
      %p151 = scmp.ne.s32.totalorder %s136, %s150
      %p152 = scmp.eq.s32.totalorder %s21, 0
      %p153 = por %p151, %p152
      %s154 = ssub.s32 %s15, %s22
      %p155 = scmp.eq.s32.totalorder %s154, 0
      %s157 = sadd.s32 %s156, 1
      %s158 = scalar_select %p155, %s156, %s157
      %p161 = pneg %p155
      %p162 = scmp.eq.s32.totalorder %s15, 1
      %p163 = por %p161, %p162
      %p164 = scmp.ne.s32.totalorder %s156, %s159
      %p165 = scmp.eq.s32.totalorder %s15, 0
      %p166 = por %p164, %p165
      %p167 = scmp.ne.s32.totalorder %s156, %s159
      %p168 = scmp.eq.s32.totalorder %s20, 1
      %p169 = por %p167, %p168
      %p170 = scmp.ne.s32.totalorder %s159, %s160
      %p171 = scmp.eq.s32.totalorder %s20, 0
      %p172 = por %p170, %p171
      %p173 = scmp.ne.s32.totalorder %s159, %s160
      %p174 = scmp.eq.s32.totalorder %s21, 1
      %p175 = por %p173, %p174
      %p177 = scmp.ne.s32.totalorder %s160, %s176
      %p178 = scmp.eq.s32.totalorder %s21, 0
      %p179 = por %p177, %p178
      %p180 = scmp.le.s32.totalorder 1, %s15
      %p181 = scmp.lt.s32.totalorder %s15, 3
      %p182 = pnand %p180, %p181
      %p183 = pneg %p182
      // Predicated region
      $region9: #{tpu_custom_call.1} parent=5 // pred_check
        _
      $region10: #{tpu_custom_call.1} parent=5 // pred_check_branch
        %185 = sbr.rel (%p182) target = $region12
      $region11: #{tpu_custom_call.1} parent=5 // pred_region
        %s186 = ssub.s32 %s15, 1
        // Predicated region
        $region13: #{tpu_custom_call.1} parent=11 // pred_check
          %p187 = pneg %p62
        $region14: #{tpu_custom_call.1} parent=11 // pred_check_branch
          %189 = sbr.rel (%p187) target = $region16
        $region15: #{tpu_custom_call.1} parent=11 // pred_region
          _
        $region16: #{tpu_custom_call.1} parent=11 // pred_fallthru
          _
        // Predicated region
        $region17: #{tpu_custom_call.1} parent=11 // pred_check
          %p190 = pneg %p83
        $region18: #{tpu_custom_call.1} parent=11 // pred_check_branch
          %192 = sbr.rel (%p190) target = $region20
        $region19: #{tpu_custom_call.1} parent=11 // pred_region
          _
        $region20: #{tpu_custom_call.1} parent=11 // pred_fallthru
          _
        // Predicated region
        $region21: #{tpu_custom_call.1} parent=11 // pred_check
          %p193 = pneg %p104
        $region22: #{tpu_custom_call.1} parent=11 // pred_check_branch
          %195 = sbr.rel (%p193) target = $region24
        $region23: #{tpu_custom_call.1} parent=11 // pred_region
          _
        $region24: #{tpu_custom_call.1} parent=11 // pred_fallthru
          _
        // Predicated region
        $region25: #{tpu_custom_call.1} parent=11 // pred_check
          %p196 = pneg %p125
        $region26: #{tpu_custom_call.1} parent=11 // pred_check_branch
          %198 = sbr.rel (%p196) target = $region28
        $region27: #{tpu_custom_call.1} parent=11 // pred_region
          _
        $region28: #{tpu_custom_call.1} parent=11 // pred_fallthru
          _
        // Predicated region
        $region29: #{tpu_custom_call.1} parent=11 // pred_check
          %p199 = pneg %p146
        $region30: #{tpu_custom_call.1} parent=11 // pred_check_branch
          %201 = sbr.rel (%p199) target = $region32
        $region31: #{tpu_custom_call.1} parent=11 // pred_region
          _
        $region32: #{tpu_custom_call.1} parent=11 // pred_fallthru
          _
      $region12: #{tpu_custom_call.1} parent=5 // pred_fallthru
        _
      %p202 = scmp.lt.s32.totalorder %s15, 2
      // Predicated region
      $region33: #{tpu_custom_call.1} parent=5 // pred_check
        %p203 = pneg %p202
      $region34: #{tpu_custom_call.1} parent=5 // pred_check_branch
        %205 = sbr.rel (%p203) target = $region36
      $region35: #{tpu_custom_call.1} parent=5 // pred_region
        // Predicated region
        $region37: #{tpu_custom_call.1} parent=35 // pred_check
          %p206 = pneg %p35
        $region38: #{tpu_custom_call.1} parent=35 // pred_check_branch
          %208 = sbr.rel (%p206) target = $region40
        $region39: #{tpu_custom_call.1} parent=35 // pred_region
          %p209 = scmp.lt.s32.totalorder %s15, 1
          %s210 = scalar_select %p209, %s15, 1
          %s211 = smul.addr %s210, 2
          %s212 = smul.addr %s211, 8
          %s213 = scalar_lea.vmem %s0, %s212
        $region40: #{tpu_custom_call.1} parent=35 // pred_fallthru
          _
      $region36: #{tpu_custom_call.1} parent=5 // pred_fallthru
        _
      %p214 = scmp.le.s32.totalorder 1, %s15
      %p215 = scmp.lt.s32.totalorder %s15, 3
      %p216 = pnand %p214, %p215
      %p217 = pneg %p216
      // Predicated region
      $region41: #{tpu_custom_call.1} parent=5 // pred_check
        _
      $region42: #{tpu_custom_call.1} parent=5 // pred_check_branch
        %219 = sbr.rel (%p216) target = $region44
      $region43: #{tpu_custom_call.1} parent=5 // pred_region
        %s220 = ssub.s32 %s15, 1
        %p221 = scmp.lt.s32.totalorder %s20, 1
        %s222 = scalar_select %p221, %s20, 1
        %s223 = smul.addr %s222, 2
        %s224 = smul.addr %s223, 8
        %s225 = scalar_lea.vmem %s0, %s224
        %p226 = pneg %p41
        %p227 = pneg %p38
        %p228 = pneg %p62
        %p229 = pneg %p59
        %p230 = pneg %p83
        %p231 = pneg %p80
        %p232 = pneg %p104
        %p233 = pneg %p101
        %p234 = pneg %p125
        %p235 = pneg %p122
        %p236 = pneg %p146
        %p237 = pneg %p143
        %p238 = pneg %p172
        %p239 = pneg %p169
        %s240 = sand.u32 %s159, 1
        %s241 = scalar_lea.sflag [#allocation3], %s240
        %s242 = sand.u32 %s159, 1
        %s243 = smul.addr %s242, 16
        %s244 = scalar_lea.vmem [#allocation2], %s243
        %p245 = scmp.lt.s32.totalorder %s20, 1
        %s246 = scalar_select %p245, %s20, 1
        %s247 = smul.addr %s246, 2
        %s248 = smul.addr %s247, 8
        %s249 = scalar_lea.vmem %s0, %s248
        %v250 = vld [vmem:[%s249] sm:$0xff]
        %v251 = vld [vmem:[%s249 + $0x8] sm:$0xff]
        %v252 = vld [vmem:[%s5] sm:$0xff]
        %v253 = vld [vmem:[%s5 + $0x8] sm:$0xff]
        %v254 = vld [vmem:[%s5 + $0x10] sm:$0xff]
        %v255 = vld [vmem:[%s5 + $0x18] sm:$0xff]
        %vm256 = vcmask 261120
        %v258 = vsel %vm256, %v250, 0
        %v261 = vsel %vm256, %v251, 0
        %263 = vmatpush.msra.mxu0 0.0
        %264 = vmatpush.msra.mxu0 0.0
        %265 = vmatpush.msra.mxu0 0.0
        %266 = vmatpush.msra.mxu0 0.0
        %267 = vmatpush.msra.mxu0 0.0
        %268 = vmatpush.msra.mxu0 0.0
        %269 = vmatpush.msra.mxu0 0.0
        %270 = vmatpush.msra.mxu0 0.0
        %271 = vmatpush.msra.mxu0 0.0
        %272 = vmatpush.msra.mxu0 0.0
        %273 = vmatpush.msra.mxu0 0.0
        %274 = vmatpush.msra.mxu0 0.0
        %275 = vmatpush.msra.mxu0 %v255
        %276 = vmatpush.msra.mxu0 %v254
        %277 = vmatpush.msra.mxu0 %v253
        %278 = vmatpush.msra.mxu0 %v252
        %279 = vmatmul.f32.gmra.mxu0 %v258
        %v280 = vpop.f32.mrf.mxu0
        %v281 = vadd.f32 0.0, %v280
        %282 = vmatmul.f32.gmra.mxu0 %v261
        %v283 = vpop.f32.mrf.mxu0
        %v284 = vadd.f32 0.0, %v283
        %285 = vdwg.mxu0
        %v286 = vmul.f32 %v281, 0.03125
        %v287 = vmul.f32 %v284, 0.03125
        %v288 = vld [vmem:[%s1] sm:$0xff]
        %v289 = vld [vmem:[%s2] sm:$0xff]
        %vm290 = vcmask 130048
        %v292 = vsel %vm290, %v288, 0
        %294 = vmatpush.msra.mxu0 0.0
        %295 = vmatpush.msra.mxu0 0.0
        %296 = vmatpush.msra.mxu0 0.0
        %297 = vmatpush.msra.mxu0 0.0
        %298 = vmatpush.msra.mxu0 0.0
        %299 = vmatpush.msra.mxu0 0.0
        %300 = vmatpush.msra.mxu0 0.0
        %301 = vmatpush.msra.mxu0 0.0
        %302 = vmatpush.msra.mxu0 0.0
        %303 = vmatpush.msra.mxu0 0.0
        %304 = vmatpush.msra.mxu0 0.0
        %305 = vmatpush.msra.mxu0 0.0
        %306 = vmatpush.msra.mxu0 0.0
        %307 = vmatpush.msra.mxu0 0.0
        %308 = vmatpush.msra.mxu0 %v287
        %309 = vmatpush.msra.mxu0 %v286
        %310 = vmatmul.f32.gmra.mxu0 %v292
        %v311 = vpop.f32.mrf.mxu0
        %v312 = vadd.f32 %v289, %v311
        %313 = vdwg.mxu0
        %v314 = vmax.f32 %v312, 0.0
        %v315 = vld [vmem:[%s3] sm:$0xff]
        %v316 = vld [vmem:[%s3 + $0x8] sm:$0xff]
        %v317 = vld [vmem:[%s4] sm:$0xff]
        %v318 = vld [vmem:[%s4 + $0x8] sm:$0xff]
        %vm319 = vcmask 64512
        %v321 = vsel %vm319, %v315, 0
        %v324 = vsel %vm319, %v316, 0
        %326 = vmatpush.msra.mxu0 0.0
        %327 = vmatpush.msra.mxu0 0.0
        %328 = vmatpush.msra.mxu0 0.0
        %329 = vmatpush.msra.mxu0 0.0
        %330 = vmatpush.msra.mxu0 0.0
        %331 = vmatpush.msra.mxu0 0.0
        %332 = vmatpush.msra.mxu0 0.0
        %333 = vmatpush.msra.mxu0 0.0
        %334 = vmatpush.msra.mxu0 0.0
        %335 = vmatpush.msra.mxu0 0.0
        %336 = vmatpush.msra.mxu0 0.0
        %337 = vmatpush.msra.mxu0 0.0
        %338 = vmatpush.msra.mxu0 0.0
        %339 = vmatpush.msra.mxu0 0.0
        %340 = vmatpush.msra.mxu0 0.0
        %341 = vmatpush.msra.mxu0 %v314
        %342 = vmatmul.f32.gmra.mxu0 %v321
        %v343 = vpop.f32.mrf.mxu0
        %v344 = vadd.f32 %v317, %v343
        %345 = vmatmul.f32.gmra.mxu0 %v324
        %v346 = vpop.f32.mrf.mxu0
        %v347 = vadd.f32 %v318, %v346
        %348 = vdwg.mxu0
        %v349 = vxor.u32 %v344, 2147483648
        %v350 = vxor.u32 %v347, 2147483648
        %v351 = vmul.f32 %v349, 1.442695
        %v352 = vpow.pop %v351
        %v353 = vmul.f32 %v350, 1.442695
        %v354 = vpow.pop %v353
        %v355 = vadd.f32 %v352, 1.0
        %v356 = vadd.f32 %v354, 1.0
        %v357 = vrcp.pop %v355
        %v358 = vmul.f32 %v355, %v357
        %v359 = vsub.f32 1.0, %v358
        %v360 = vmul.f32 %v357, %v359
        %v361 = vadd.f32 %v357, %v360
        %vm362 = vweird.f32 %v355
        %vm363 = vweird.f32 %v357
        %vm364 = vmor %vm362, %vm363
        %v365 = vsel %vm364, %v357, %v361
        %v366 = vand.u32 2147483647, %v355
        %vm367 = vcmp.eq.f32.partialorder %v366, 8.507059e+37
        %v368 = vand.u32 %v355, 2147483648
        %v369 = vor.u32 1.1754944e-38, %v368
        %v370 = vsel %vm367, %v369, %v365
        %v371 = vmul.f32 1.0, %v370
        %v372 = vrcp.pop %v356
        %v373 = vmul.f32 %v356, %v372
        %v374 = vsub.f32 1.0, %v373
        %v375 = vmul.f32 %v372, %v374
        %v376 = vadd.f32 %v372, %v375
        %vm377 = vweird.f32 %v356
        %vm378 = vweird.f32 %v372
        %vm379 = vmor %vm377, %vm378
        %v380 = vsel %vm379, %v372, %v376
        %v381 = vand.u32 2147483647, %v356
        %vm382 = vcmp.eq.f32.partialorder %v381, 8.507059e+37
        %v383 = vand.u32 %v356, 2147483648
        %v384 = vor.u32 1.1754944e-38, %v383
        %v385 = vsel %vm382, %v384, %v380
        %v386 = vmul.f32 1.0, %v385
        %388 = vset.pattern.permute.xlu0 0
        %389 = vperm.xlu0 %388, %v371
        %v390 = vpop.permute.xlu0 %389
        %393 = vset.pattern.permute.xlu0 0
        %394 = vperm.xlu0 %393, %v386
        %v395 = vpop.permute.xlu0 %394
        %v397 = vmul.f32 %v250, %v390
        %v398 = vmul.f32 %v251, %v395
        %399 = vst.msk [vmem:[%s244] sm:$0xff] %vm256, %v397
        %400 = vst.msk [vmem:[%s244 + $0x8] sm:$0xff] %vm256, %v398
        %s401 = sand.u32 %s159, 1
        %s402 = scalar_lea.sflag [#allocation3], %s401
        %s403 = sand.u32 %s159, 1
        %s404 = smul.addr %s403, 16
        %s405 = scalar_lea.vmem [#allocation2], %s404
        // Predicated region
        $region45: #{tpu_custom_call.1} parent=43 // pred_check
          %p406 = pneg %p169
        $region46: #{tpu_custom_call.1} parent=43 // pred_check_branch
          %408 = sbr.rel (%p406) target = $region48
        $region47: #{tpu_custom_call.1} parent=43 // pred_region
          %410 = vsyncadd %s402, 0
          %s411 = smul.addr %s20, 2
          %s412 = smul.addr %s411, 8
          %s413 = scalar_lea.hbm %s6, %s412
          %s414 = sshll.u32 %s405, 4
          %s415 = int_to_ptr.vmem [resolvable:$true] %s414
          %s416 = sshll.u32 %s413, 4
          %s417 = int_to_ptr.hbm [resolvable:$true] %s416
          %422 = dma.vmem_to_hbm [thread:$0]  %s415, 256, %s417, %s402, 128, 128, 8
        $region48: #{tpu_custom_call.1} parent=43 // pred_fallthru
          _
      $region44: #{tpu_custom_call.1} parent=5 // pred_fallthru
        _
      %p423 = scmp.le.s32.totalorder 2, %s15
      // Predicated region
      $region49: #{tpu_custom_call.1} parent=5 // pred_check
        %p424 = pneg %p423
      $region50: #{tpu_custom_call.1} parent=5 // pred_check_branch
        %426 = sbr.rel (%p424) target = $region52
      $region51: #{tpu_custom_call.1} parent=5 // pred_region
        %s427 = ssub.s32 %s15, 2
        // Predicated region
        $region53: #{tpu_custom_call.1} parent=51 // pred_check
          %p428 = pneg %p175
        $region54: #{tpu_custom_call.1} parent=51 // pred_check_branch
          %430 = sbr.rel (%p428) target = $region56
        $region55: #{tpu_custom_call.1} parent=51 // pred_region
          %s431 = sand.u32 %s160, 1
          %s432 = scalar_lea.sflag [#allocation3], %s431
          %s433 = sand.u32 %s160, 1
          %s434 = smul.addr %s433, 16
          %s435 = scalar_lea.vmem [#allocation2], %s434
          %437 = dma.done %s432, 256
        $region56: #{tpu_custom_call.1} parent=51 // pred_fallthru
          _
      $region52: #{tpu_custom_call.1} parent=5 // pred_fallthru
        _
    $region6: #{tpu_custom_call.1} parent=1 // loop_footer
      %s19 = sadd.s32 1, %s15
    $region7: #{tpu_custom_call.1} parent=1 // loop_footer_branch
      %14 = sbr.rel target = $region3
    $region8: #{tpu_custom_call.1} parent=1 // loop_exit
      _
    %438 = vsyncpa [#allocation3], 1
    %s439 = scalar_lea.sflag [#allocation3], 1
    %440 = vsyncpa %s439, 1

</llo_original>
